<compile_context>
chip_gen: v6e
topology: v6e:2x2x1
jax: 0.10.0
libtpu: 0.0.40
codegen_flags: <defaults>
</compile_context>

<pallas_src>
import functools

import numpy as np
import jax
import jax.numpy as jnp
from jax.experimental import pallas as pl
from jax.experimental.pallas import tpu as pltpu


# ----------------------------- Pallas kernel -----------------------------

def _fused_packed_up_kernel(x1_ref, x2_ref, ah_ref, w1_ref, s1_ref, t1_ref,
                            w2_ref, s2_ref, t2_ref, o_ref):
    """Fused _PackedUp forward for one batch image, fully lane-dense.

    x1_ref: (1, H1, W1*C1) f32   decoder feature (half resolution), lane-dense
    x2_ref: (1, Ht, Wt*C2) f32   skip connection, lane-dense
    ah_ref: (Ht, H1)       f32   H bilinear-interp matrix (F.pad zero rows folded in)
    w1_ref: (3*Wt*C2 + 3*W1*C1, Wt*Cmid) f32  conv1 banded weights; fold: W-interp (Kronecker),
                                              F.pad cols, conv W zero-padding, packed groups,
                                              per-estimator concat permutation, 3x3 dx band
    s1/t1 : (1, Wt*Cmid)   f32   conv1 bias + eval-BatchNorm as W-tiled scale/shift
    w2_ref: (3*Wt*Cmid, Wt*Cout) f32  conv2 banded weights (groups + W-padding + dx band folded)
    s2/t2 : (1, Wt*Cout)   f32
    o_ref : (1, Ht, Wt*Cout) f32 lane-dense output
    """
    _, H1, WC1 = x1_ref.shape
    _, Ht, WC2 = x2_ref.shape
    WCm = w1_ref.shape[1]

    # Bilinear H-interpolation (+ F.pad zero rows) of x1: (Ht, H1) @ (H1, W1*C1).
    x1h = jnp.dot(ah_ref[...], x1_ref[0], preferred_element_type=jnp.float32)

    # conv1 as a single banded matmul over [3 H-taps of x2, 3 H-taps of x1h].
    z1 = jnp.zeros((1, WC1), jnp.float32)
    z2 = jnp.zeros((1, WC2), jnp.float32)
    x1hp = jnp.concatenate([z1, x1h, z1], axis=0)              # (Ht+2, W1*C1)
    x2p = jnp.concatenate([z2, x2_ref[0], z2], axis=0)         # (Ht+2, Wt*C2)
    patches1 = jnp.concatenate(
        [x2p[0:Ht], x2p[1:Ht + 1], x2p[2:Ht + 2],
         x1hp[0:Ht], x1hp[1:Ht + 1], x1hp[2:Ht + 2]], axis=1)  # (Ht, 3*WC2 + 3*WC1)
    acc1 = jnp.dot(patches1, w1_ref[...], preferred_element_type=jnp.float32)
    y1 = jnp.maximum(acc1 * s1_ref[...] + t1_ref[...], 0.0)    # (Ht, Wt*Cmid), lane-dense

    # conv2 as a single banded matmul over 3 H-taps of y1.
    zm = jnp.zeros((1, WCm), jnp.float32)
    y1p = jnp.concatenate([zm, y1, zm], axis=0)                # (Ht+2, Wt*Cmid)
    patches2 = jnp.concatenate([y1p[0:Ht], y1p[1:Ht + 1], y1p[2:Ht + 2]], axis=1)
    acc2 = jnp.dot(patches2, w2_ref[...], preferred_element_type=jnp.float32)
    y2 = jnp.maximum(acc2 * s2_ref[...] + t2_ref[...], 0.0)    # (Ht, Wt*Cout)

    o_ref[0] = y2.astype(o_ref.dtype)


# ----------------------------- trace-time helpers -----------------------------

def _interp_matrix(n_out, n_in):
    """align_corners=True bilinear interpolation matrix (n_out, n_in), numpy f32."""
    A = np.zeros((n_out, n_in), np.float32)
    if n_in == 1:
        A[:, 0] = 1.0
        return A
    for i in range(n_out):
        src = i * (n_in - 1) / (n_out - 1) if n_out > 1 else 0.0
        i0 = min(int(np.floor(src)), n_in - 1)
        i1 = min(i0 + 1, n_in - 1)
        w = src - i0
        A[i, i0] += 1.0 - w
        A[i, i1] += w
    return A


def _block_diag_weight(conv_w, cin_full, groups):
    """PackedConv2d weight (Cout, Cin_g, 3, 3) -> dense (3, 3, cin_full, Cout), zero off-group."""
    cout, cin_g = conv_w.shape[0], conv_w.shape[1]
    cout_g = cout // groups
    assert cin_g * groups == cin_full
    wd = jnp.zeros((3, 3, cin_full, cout), conv_w.dtype)
    for g in range(groups):
        blk = jnp.transpose(conv_w[g * cout_g:(g + 1) * cout_g], (2, 3, 1, 0))
        wd = wd.at[:, :, g * cin_g:(g + 1) * cin_g, g * cout_g:(g + 1) * cout_g].set(blk)
    return wd


def _band_weight(sel_mats, wk):
    """sum_kx kron(sel_mats[kx], wk[kx]).

    sel_mats[kx]: numpy (Win, Wout) maps input W-positions to output W-positions for tap kx
                  (conv zero-padding in W and/or the bilinear W-interp folded in here).
    wk: traced (3, Cin, Cout).  Returns (Win*Cin, Wout*Cout)."""
    win, wout = sel_mats[0].shape
    cin, cout = wk.shape[1], wk.shape[2]
    out = jnp.zeros((win * cin, wout * cout), wk.dtype)
    for kx in range(3):
        s = jnp.asarray(sel_mats[kx])
        out = out + (s[:, None, :, None] * wk[kx][None, :, None, :]
                     ).reshape(win * cin, wout * cout)
    return out


def _fold_bn(conv_b, bn, width, eps=1e-5):
    """conv bias + eval-mode BatchNorm -> W-tiled (1, width*C) scale/shift."""
    s = bn['weight'] / jnp.sqrt(bn['var'] + eps)
    t = (conv_b - bn['mean']) * s + bn['bias']
    c = s.shape[0]
    return (jnp.tile(s, width).reshape(1, width * c).astype(jnp.float32),
            jnp.tile(t, width).reshape(1, width * c).astype(jnp.float32))


# --------------------------- parameter construction ---------------------------

def init_packed_up_params(key, in_channels, out_channels, alpha, num_estimators, gamma):
    """_PackedUp(bilinear=True): _PackedDoubleConv(in, out, mid=in//2)."""
    mid_channels = in_channels // 2
    G = gamma * num_estimators                     # packed-conv groups (first=False)
    ext_in1 = int(in_channels * alpha)             # conv1 extended in
    ext_mid = int(mid_channels * alpha)            # conv1 extended out == BN1 == conv2 in
    ext_out = int(out_channels * alpha)            # conv2 extended out == BN2
    assert ext_in1 % G == 0 and ext_mid % G == 0 and ext_out % G == 0

    ks = jax.random.split(key, 4)

    def conv_init(k, cout, cin_g):
        kw, kb = jax.random.split(k)
        bound = 1.0 / np.sqrt(cin_g * 9)
        w = jax.random.uniform(kw, (cout, cin_g, 3, 3), jnp.float32, -bound, bound)
        b = jax.random.uniform(kb, (cout,), jnp.float32, -bound, bound)
        return w, b

    def bn_init(k, c):
        kw, kb, km, kv = jax.random.split(k, 4)
        return dict(weight=jax.random.uniform(kw, (c,), jnp.float32, 0.5, 1.5),
                    bias=0.1 * jax.random.normal(kb, (c,), jnp.float32),
                    mean=0.1 * jax.random.normal(km, (c,), jnp.float32),
                    var=jax.random.uniform(kv, (c,), jnp.float32, 0.5, 1.5))

    w1, b1 = conv_init(ks[0], ext_mid, ext_in1 // G)
    w2, b2 = conv_init(ks[1], ext_out, ext_mid // G)
    return dict(conv1_w=w1, conv1_b=b1, bn1=bn_init(ks[2], ext_mid),
                conv2_w=w2, conv2_b=b2, bn2=bn_init(ks[3], ext_out))


# --------------------------------- forward ---------------------------------

def packed_up_forward(params, x1, x2, *, num_estimators, groups):
    # x1, x2: NCHW float32 (PyTorch-facing layout)
    B, C1, H1, W1 = x1.shape
    _, C2, Ht, Wt = x2.shape
    M, G = num_estimators, groups

    # --- bilinear upsample (align_corners=True) + torch's quirky F.pad, as constant matrices ---
    H_up, W_up = 2 * H1, 2 * W1
    diff_y, diff_x = Ht - H_up, Wt - W_up
    # Bug-for-bug match of torch's F.pad(x1, [dx//2, dy//2, dx-dx//2, dy-dy//2]):
    # W gets (left=dx//2, right=dy//2), H gets (top=dx-dx//2, bottom=dy-dy//2).
    top, bottom = diff_x - diff_x // 2, diff_y - diff_y // 2
    left, right = diff_x // 2, diff_y // 2
    assert top + H_up + bottom == Ht and left + W_up + right == Wt, \
        "padded upsample size must match skip size (same constraint as the torch code)"

    ah = np.zeros((Ht, H1), np.float32)
    ah[top:top + H_up] = _interp_matrix(H_up, H1)            # (Ht, H1), F.pad rows are zero
    aw = np.zeros((Wt, W1), np.float32)
    aw[left:left + W_up] = _interp_matrix(W_up, W1)          # (Wt, W1), F.pad rows are zero

    # --- fold groups / estimator-concat / W-interp / W-padding into banded weight matrices ---
    Cmid = params['conv1_w'].shape[0]
    Cout = params['conv2_w'].shape[0]
    c1g, c2g = C1 // M, C2 // M
    # torch concat order per estimator m is [x2_m (c2g ch), x1_m (c1g ch)] -> channel permutation
    perm_x2 = np.concatenate([m * (c1g + c2g) + np.arange(c2g) for m in range(M)])
    perm_x1 = np.concatenate([m * (c1g + c2g) + c2g + np.arange(c1g) for m in range(M)])

    wd1 = _block_diag_weight(params['conv1_w'], C1 + C2, G)  # (3,3,C1+C2,Cmid)
    wd1_x2 = wd1[:, :, perm_x2, :]                           # rows indexed by x2's own channels
    wd1_x1 = wd1[:, :, perm_x1, :]                           # rows indexed by x1's own channels
    wd2 = _block_diag_weight(params['conv2_w'], Cmid, G)     # (3,3,Cmid,Cout)

    # Per-kx W-selection matrices: identity band (conv padding=1, OOB dropped) and the same band
    # composed with the bilinear W-interp, so the kernel never materialises the W-upsampled x1.
    eye_shift = [np.eye(Wt, k=1 - kx, dtype=np.float32) for kx in range(3)]   # (Wt, Wt)
    aw_shift = [aw.T @ eye_shift[kx] for kx in range(3)]                      # (W1, Wt)

    w1_mat = jnp.concatenate(
        [_band_weight(eye_shift, wd1_x2[dy]) for dy in range(3)]
        + [_band_weight(aw_shift, wd1_x1[dy]) for dy in range(3)],
        axis=0)                                              # (3*Wt*C2 + 3*W1*C1, Wt*Cmid)
    w2_mat = jnp.concatenate(
        [_band_weight(eye_shift, wd2[dy]) for dy in range(3)], axis=0)  # (3*Wt*Cmid, Wt*Cout)

    s1, t1 = _fold_bn(params['conv1_b'], params['bn1'], Wt)
    s2, t2 = _fold_bn(params['conv2_b'], params['bn2'], Wt)

    # --- lane-dense (B, H, W*C) input slabs; single entry relayout, everything downstream fused ---
    # TODO(synk): an NHWC-native caller could hand these in directly and skip the boundary transposes.
    x1d = jnp.transpose(x1, (0, 2, 3, 1)).reshape(B, H1, W1 * C1)
    x2d = jnp.transpose(x2, (0, 2, 3, 1)).reshape(B, Ht, Wt * C2)

    k1 = 3 * Wt * C2 + 3 * W1 * C1
    flops = 2 * B * Ht * (H1 * W1 * C1 + k1 * Wt * Cmid + 3 * Wt * Cmid * Wt * Cout)
    bytes_accessed = 4 * (x1d.size + x2d.size + ah.size + w1_mat.size + w2_mat.size
                          + s1.size + t1.size + s2.size + t2.size + B * Ht * Wt * Cout)

    y = pl.pallas_call(
        _fused_packed_up_kernel,
        out_shape=jax.ShapeDtypeStruct((B, Ht, Wt * Cout), jnp.float32),
        grid=(B,),
        in_specs=[
            pl.BlockSpec((1, H1, W1 * C1), lambda b: (b, 0, 0)),
            pl.BlockSpec((1, Ht, Wt * C2), lambda b: (b, 0, 0)),
            pl.BlockSpec((Ht, H1), lambda b: (0, 0)),
            pl.BlockSpec((k1, Wt * Cmid), lambda b: (0, 0)),
            pl.BlockSpec((1, Wt * Cmid), lambda b: (0, 0)),
            pl.BlockSpec((1, Wt * Cmid), lambda b: (0, 0)),
            pl.BlockSpec((3 * Wt * Cmid, Wt * Cout), lambda b: (0, 0)),
            pl.BlockSpec((1, Wt * Cout), lambda b: (0, 0)),
            pl.BlockSpec((1, Wt * Cout), lambda b: (0, 0)),
        ],
        out_specs=pl.BlockSpec((1, Ht, Wt * Cout), lambda b: (b, 0, 0)),
        compiler_params=pltpu.CompilerParams(dimension_semantics=("parallel",)),
        cost_estimate=pl.CostEstimate(flops=flops, transcendentals=0,
                                      bytes_accessed=bytes_accessed),
    )(x1d, x2d, jnp.asarray(ah), w1_mat, s1, t1, w2_mat, s2, t2)

    # Back to the PyTorch-facing NCHW layout (tiny relayout; a consumer accepting the lane-dense
    # (B, H, W*Cout) form could skip it).
    y = y.reshape(B, Ht, Wt, Cout)
    return jnp.transpose(y, (0, 3, 1, 2))


# ----------------------------------- main -----------------------------------

if __name__ == "__main__":
    key = jax.random.PRNGKey(0)
    # _PackedUp(in_channels=8, out_channels=4, alpha=2, num_estimators=2, gamma=1, bilinear=True)
    in_channels, out_channels = 8, 4
    alpha, num_estimators, gamma = 2, 2, 1
    B = 2
    G = gamma * num_estimators

    k_p, k_x1, k_x2 = jax.random.split(key, 3)
    params = init_packed_up_params(k_p, in_channels, out_channels, alpha, num_estimators, gamma)

    # x1: decoder feature (half resolution), x2: skip connection (full resolution); both carry
    # int(in_channels/2 * alpha) = 8 extended channels so the per-estimator concat has
    # int(in_channels * alpha) = 16 channels, matching conv1.
    c_ext = int(in_channels // 2 * alpha)
    x1 = jax.random.normal(k_x1, (B, c_ext, 8, 8), jnp.float32)
    x2 = jax.random.normal(k_x2, (B, c_ext, 16, 16), jnp.float32)

    fwd = jax.jit(functools.partial(packed_up_forward,
                                    num_estimators=num_estimators, groups=G))
    out = jax.block_until_ready(fwd(params, x1, x2))

    expected_cout = int(out_channels * alpha)
    assert out.shape == (B, expected_cout, 16, 16), out.shape
    assert bool(jnp.all(jnp.isfinite(out)))
    print("KERNEL_OK")
</pallas_src>

<mosaic_0001>
module attributes {stable_mosaic.version = 11 : i64} {
  func.func @_fused_packed_up_kernel(%arg0: i32, %arg1: memref<1x8x64xf32, #tpu.memory_space<vmem>>, %arg2: memref<1x16x128xf32, #tpu.memory_space<vmem>>, %arg3: memref<16x8xf32, #tpu.memory_space<vmem>>, %arg4: memref<576x128xf32, #tpu.memory_space<vmem>>, %arg5: memref<1x128xf32, #tpu.memory_space<vmem>>, %arg6: memref<1x128xf32, #tpu.memory_space<vmem>>, %arg7: memref<384x128xf32, #tpu.memory_space<vmem>>, %arg8: memref<1x128xf32, #tpu.memory_space<vmem>>, %arg9: memref<1x128xf32, #tpu.memory_space<vmem>>, %arg10: memref<1x16x128xf32, #tpu.memory_space<vmem>>) attributes {dimension_semantics = [#tpu.dimension_semantics<parallel>], iteration_bounds = array<i64: 2>, scalar_prefetch = 0 : i64, scratch_operands = 0 : i64, tpu.core_type = #tpu.core_type<tc>, window_params = [{transform_indices = @transform_0, window_bounds = array<i64: 1, 8, 64>}, {transform_indices = @transform_1, window_bounds = array<i64: 1, 16, 128>}, {pipeline_mode = #tpu.pipeline_mode<synchronous>, transform_indices = @transform_2, window_bounds = array<i64: 16, 8>}, {pipeline_mode = #tpu.pipeline_mode<synchronous>, transform_indices = @transform_3, window_bounds = array<i64: 576, 128>}, {pipeline_mode = #tpu.pipeline_mode<synchronous>, transform_indices = @transform_4, window_bounds = array<i64: 1, 128>}, {pipeline_mode = #tpu.pipeline_mode<synchronous>, transform_indices = @transform_5, window_bounds = array<i64: 1, 128>}, {pipeline_mode = #tpu.pipeline_mode<synchronous>, transform_indices = @transform_6, window_bounds = array<i64: 384, 128>}, {pipeline_mode = #tpu.pipeline_mode<synchronous>, transform_indices = @transform_7, window_bounds = array<i64: 1, 128>}, {pipeline_mode = #tpu.pipeline_mode<synchronous>, transform_indices = @transform_8, window_bounds = array<i64: 1, 128>}, {transform_indices = @transform_9, window_bounds = array<i64: 1, 16, 128>}]} {
    %c0 = arith.constant 0 : index
    %c0_0 = arith.constant 0 : index
    %0 = vector.load %arg3[%c0, %c0_0] : memref<16x8xf32, #tpu.memory_space<vmem>>, vector<16x8xf32>
    %c0_1 = arith.constant 0 : index
    %c0_2 = arith.constant 0 : index
    %c0_3 = arith.constant 0 : index
    %1 = vector.load %arg1[%c0_1, %c0_2, %c0_3] : memref<1x8x64xf32, #tpu.memory_space<vmem>>, vector<1x8x64xf32>
    %2 = vector.shape_cast %1 : vector<1x8x64xf32> to vector<8x64xf32>
    %cst = arith.constant dense<0.000000e+00> : vector<16x64xf32>
    %3 = tpu.matmul %0, %2, %cst {dimension_numbers = #tpu.dot_dimension_numbers<[1], [0], [0], [1], [0, 0, 1, 1], [], []>} : vector<16x8xf32>, vector<8x64xf32>, vector<16x64xf32> -> vector<16x64xf32>
    %cst_4 = arith.constant 0.000000e+00 : f32
    %4 = vector.broadcast %cst_4 : f32 to vector<1x64xf32>
    %cst_5 = arith.constant 0.000000e+00 : f32
    %5 = vector.broadcast %cst_5 : f32 to vector<1x128xf32>
    %6 = tpu.concatenate %4, %3, %4 in 0 : vector<1x64xf32>, vector<16x64xf32>, vector<1x64xf32> -> vector<18x64xf32>
    %c0_6 = arith.constant 0 : index
    %c0_7 = arith.constant 0 : index
    %c0_8 = arith.constant 0 : index
    %7 = vector.load %arg2[%c0_6, %c0_7, %c0_8] : memref<1x16x128xf32, #tpu.memory_space<vmem>>, vector<1x16x128xf32>
    %8 = vector.shape_cast %7 : vector<1x16x128xf32> to vector<16x128xf32>
    %9 = tpu.concatenate %5, %8, %5 in 0 : vector<1x128xf32>, vector<16x128xf32>, vector<1x128xf32> -> vector<18x128xf32>
    %10 = vector.extract_strided_slice %9 {offsets = [0, 0], sizes = [16, 128], strides = [1, 1]} : vector<18x128xf32> to vector<16x128xf32>
    %11 = vector.extract_strided_slice %9 {offsets = [1, 0], sizes = [16, 128], strides = [1, 1]} : vector<18x128xf32> to vector<16x128xf32>
    %12 = vector.extract_strided_slice %9 {offsets = [2, 0], sizes = [16, 128], strides = [1, 1]} : vector<18x128xf32> to vector<16x128xf32>
    %13 = vector.extract_strided_slice %6 {offsets = [0, 0], sizes = [16, 64], strides = [1, 1]} : vector<18x64xf32> to vector<16x64xf32>
    %14 = vector.extract_strided_slice %6 {offsets = [1, 0], sizes = [16, 64], strides = [1, 1]} : vector<18x64xf32> to vector<16x64xf32>
    %15 = vector.extract_strided_slice %6 {offsets = [2, 0], sizes = [16, 64], strides = [1, 1]} : vector<18x64xf32> to vector<16x64xf32>
    %16 = tpu.concatenate %10, %11, %12, %13, %14, %15 in 1 : vector<16x128xf32>, vector<16x128xf32>, vector<16x128xf32>, vector<16x64xf32>, vector<16x64xf32>, vector<16x64xf32> -> vector<16x576xf32>
    %c0_9 = arith.constant 0 : index
    %c0_10 = arith.constant 0 : index
    %17 = vector.load %arg4[%c0_9, %c0_10] : memref<576x128xf32, #tpu.memory_space<vmem>>, vector<576x128xf32>
    %cst_11 = arith.constant dense<0.000000e+00> : vector<16x128xf32>
    %18 = tpu.matmul %16, %17, %cst_11 {dimension_numbers = #tpu.dot_dimension_numbers<[1], [0], [0], [1], [0, 0, 1, 1], [], []>} : vector<16x576xf32>, vector<576x128xf32>, vector<16x128xf32> -> vector<16x128xf32>
    %c0_12 = arith.constant 0 : index
    %c0_13 = arith.constant 0 : index
    %19 = vector.load %arg5[%c0_12, %c0_13] : memref<1x128xf32, #tpu.memory_space<vmem>>, vector<1x128xf32>
    %20 = vector.broadcast %19 : vector<1x128xf32> to vector<16x128xf32>
    %21 = arith.mulf %18, %20 : vector<16x128xf32>
    %c0_14 = arith.constant 0 : index
    %c0_15 = arith.constant 0 : index
    %22 = vector.load %arg6[%c0_14, %c0_15] : memref<1x128xf32, #tpu.memory_space<vmem>>, vector<1x128xf32>
    %23 = vector.broadcast %22 : vector<1x128xf32> to vector<16x128xf32>
    %24 = arith.addf %21, %23 : vector<16x128xf32>
    %cst_16 = arith.constant 0.000000e+00 : f32
    %25 = vector.broadcast %cst_16 : f32 to vector<16x128xf32>
    %26 = arith.maximumf %24, %25 : vector<16x128xf32>
    %cst_17 = arith.constant 0.000000e+00 : f32
    %27 = vector.broadcast %cst_17 : f32 to vector<1x128xf32>
    %28 = tpu.concatenate %27, %26, %27 in 0 : vector<1x128xf32>, vector<16x128xf32>, vector<1x128xf32> -> vector<18x128xf32>
    %29 = vector.extract_strided_slice %28 {offsets = [0, 0], sizes = [16, 128], strides = [1, 1]} : vector<18x128xf32> to vector<16x128xf32>
    %30 = vector.extract_strided_slice %28 {offsets = [1, 0], sizes = [16, 128], strides = [1, 1]} : vector<18x128xf32> to vector<16x128xf32>
    %31 = vector.extract_strided_slice %28 {offsets = [2, 0], sizes = [16, 128], strides = [1, 1]} : vector<18x128xf32> to vector<16x128xf32>
    %32 = tpu.concatenate %29, %30, %31 in 1 : vector<16x128xf32>, vector<16x128xf32>, vector<16x128xf32> -> vector<16x384xf32>
    %c0_18 = arith.constant 0 : index
    %c0_19 = arith.constant 0 : index
    %33 = vector.load %arg7[%c0_18, %c0_19] : memref<384x128xf32, #tpu.memory_space<vmem>>, vector<384x128xf32>
    %cst_20 = arith.constant dense<0.000000e+00> : vector<16x128xf32>
    %34 = tpu.matmul %32, %33, %cst_20 {dimension_numbers = #tpu.dot_dimension_numbers<[1], [0], [0], [1], [0, 0, 1, 1], [], []>} : vector<16x384xf32>, vector<384x128xf32>, vector<16x128xf32> -> vector<16x128xf32>
    %c0_21 = arith.constant 0 : index
    %c0_22 = arith.constant 0 : index
    %35 = vector.load %arg8[%c0_21, %c0_22] : memref<1x128xf32, #tpu.memory_space<vmem>>, vector<1x128xf32>
    %36 = vector.broadcast %35 : vector<1x128xf32> to vector<16x128xf32>
    %37 = arith.mulf %34, %36 : vector<16x128xf32>
    %c0_23 = arith.constant 0 : index
    %c0_24 = arith.constant 0 : index
    %38 = vector.load %arg9[%c0_23, %c0_24] : memref<1x128xf32, #tpu.memory_space<vmem>>, vector<1x128xf32>
    %39 = vector.broadcast %38 : vector<1x128xf32> to vector<16x128xf32>
    %40 = arith.addf %37, %39 : vector<16x128xf32>
    %cst_25 = arith.constant 0.000000e+00 : f32
    %41 = vector.broadcast %cst_25 : f32 to vector<16x128xf32>
    %42 = arith.maximumf %40, %41 : vector<16x128xf32>
    %c0_26 = arith.constant 0 : index
    %c0_27 = arith.constant 0 : index
    %c0_28 = arith.constant 0 : index
    %43 = vector.load %arg10[%c0_26, %c0_27, %c0_28] : memref<1x16x128xf32, #tpu.memory_space<vmem>>, vector<1x16x128xf32>
    %44 = vector.shape_cast %43 : vector<1x16x128xf32> to vector<16x128xf32>
    %45 = vector.shape_cast %42 : vector<16x128xf32> to vector<1x16x128xf32>
    tpu.vector_store %arg10[%c0_26, %c0_27, %c0_28], %45 {strides = array<i32>} : memref<1x16x128xf32, #tpu.memory_space<vmem>>, vector<1x16x128xf32>,
    return
  }
  func.func @transform_0(%arg0: i32) -> (i32, i32, i32) {
    %c0_i32 = arith.constant 0 : i32
    %c0_i32_0 = arith.constant 0 : i32
    %c0_i32_1 = arith.constant 0 : i32
    return %arg0, %c0_i32, %c0_i32_0 : i32, i32, i32
  }
  func.func @transform_1(%arg0: i32) -> (i32, i32, i32) {
    %c0_i32 = arith.constant 0 : i32
    %c0_i32_0 = arith.constant 0 : i32
    %c0_i32_1 = arith.constant 0 : i32
    return %arg0, %c0_i32, %c0_i32_0 : i32, i32, i32
  }
  func.func @transform_2(%arg0: i32) -> (i32, i32) {
    %c0_i32 = arith.constant 0 : i32
    %c0_i32_0 = arith.constant 0 : i32
    %c0_i32_1 = arith.constant 0 : i32
    return %c0_i32, %c0_i32_0 : i32, i32
  }
  func.func @transform_3(%arg0: i32) -> (i32, i32) {
    %c0_i32 = arith.constant 0 : i32
    %c0_i32_0 = arith.constant 0 : i32
    %c0_i32_1 = arith.constant 0 : i32
    return %c0_i32, %c0_i32_0 : i32, i32
  }
  func.func @transform_4(%arg0: i32) -> (i32, i32) {
    %c0_i32 = arith.constant 0 : i32
    %c0_i32_0 = arith.constant 0 : i32
    %c0_i32_1 = arith.constant 0 : i32
    return %c0_i32, %c0_i32_0 : i32, i32
  }
  func.func @transform_5(%arg0: i32) -> (i32, i32) {
    %c0_i32 = arith.constant 0 : i32
    %c0_i32_0 = arith.constant 0 : i32
    %c0_i32_1 = arith.constant 0 : i32
    return %c0_i32, %c0_i32_0 : i32, i32
  }
  func.func @transform_6(%arg0: i32) -> (i32, i32) {
    %c0_i32 = arith.constant 0 : i32
    %c0_i32_0 = arith.constant 0 : i32
    %c0_i32_1 = arith.constant 0 : i32
    return %c0_i32, %c0_i32_0 : i32, i32
  }
  func.func @transform_7(%arg0: i32) -> (i32, i32) {
    %c0_i32 = arith.constant 0 : i32
    %c0_i32_0 = arith.constant 0 : i32
    %c0_i32_1 = arith.constant 0 : i32
    return %c0_i32, %c0_i32_0 : i32, i32
  }
  func.func @transform_8(%arg0: i32) -> (i32, i32) {
    %c0_i32 = arith.constant 0 : i32
    %c0_i32_0 = arith.constant 0 : i32
    %c0_i32_1 = arith.constant 0 : i32
    return %c0_i32, %c0_i32_0 : i32, i32
  }
  func.func @transform_9(%arg0: i32) -> (i32, i32, i32) {
    %c0_i32 = arith.constant 0 : i32
    %c0_i32_0 = arith.constant 0 : i32
    %c0_i32_1 = arith.constant 0 : i32
    return %arg0, %c0_i32, %c0_i32_0 : i32, i32, i32
  }
}

</mosaic_0001>

<llo_original>
// kernel: tile.23
$region0: #{tile.23}
  #allocation0 [shape = 's32[1]{0}', space=sflag, size = 0x4, scoped, tag = 'scoped memory for tile.23']
  %s0 = inlined_call_operand.vmem [shape: f32[8], index: 0, kind: input, shape index: {}]
  %s1 = inlined_call_operand.vmem [shape: f32[16,8], index: 1, kind: output, shape index: {}]
  // Predicated region
  $region2: #{tile.23} parent=0 // pred_check
    _
  $region3: #{tile.23} parent=0 // pred_check_branch
    %3 = sbr.rel (0) target = $region5
  $region4: #{tile.23} parent=0 // pred_region
    _
  $region5: #{tile.23} parent=0 // pred_fallthru
    _
  %v4 = vld [vmem:[%s0] ss:$0 sm:$0xff]
  %5 = vst [vmem:[%s1] sm:$0xff] %v4
  %s6 = scalar_lea.vmem %s1, 8
  %7 = vst [vmem:[%s6] sm:$0xff] %v4

// kernel: tile.24
$region0: #{tile.24}
  %s0 = inlined_call_operand.vmem [shape: f32[16,8], index: 0, kind: input, shape index: {}]
  %s1 = inlined_call_operand.vmem [shape: f32[1,128], index: 1, kind: output, shape index: {}]
  $region1: #{tile.24} parent=0
    #allocation0 [shape = 'u8[4096]{0}', space=vmem, size = 0x1000, scoped, tag = 'scoped mem for output reshape']
    %v2 = vld [vmem:[%s0] sm:$0x1]
    %vm3 = vcmask 64512
    %4 = vst.msk [vmem:[#allocation0] sm:$0x1] %vm3, %v2
    %s5 = scalar_lea.vmem %s0, 15
    %v6 = vld [vmem:[%s5] sm:$0x1]
    %7 = vrot.lane.b32.xlu0 %v6, 120
    %v8 = vpop.permute.xlu0 %7
    %vm9 = vcmask 1048512
    %10 = vst.msk [vmem:[#allocation0] sm:$0x1] %vm9, %v8
    %s11 = scalar_lea.vmem %s0, 14
    %v12 = vld [vmem:[%s11] sm:$0x1]
    %13 = vrot.lane.b32.xlu0 %v12, 112
    %v14 = vpop.permute.xlu0 %13
    %vm15 = vcmask 982912
    %16 = vst.msk [vmem:[#allocation0] sm:$0x1] %vm15, %v14
    %s17 = scalar_lea.vmem %s0, 13
    %v18 = vld [vmem:[%s17] sm:$0x1]
    %19 = vrot.lane.b32.xlu0 %v18, 104
    %v20 = vpop.permute.xlu0 %19
    %vm21 = vcmask 917312
    %22 = vst.msk [vmem:[#allocation0] sm:$0x1] %vm21, %v20
    %s23 = scalar_lea.vmem %s0, 12
    %v24 = vld [vmem:[%s23] sm:$0x1]
    %25 = vrot.lane.b32.xlu0 %v24, 96
    %v26 = vpop.permute.xlu0 %25
    %vm27 = vcmask 851712
    %28 = vst.msk [vmem:[#allocation0] sm:$0x1] %vm27, %v26
    %s29 = scalar_lea.vmem %s0, 11
    %v30 = vld [vmem:[%s29] sm:$0x1]
    %31 = vrot.lane.b32.xlu0 %v30, 88
    %v32 = vpop.permute.xlu0 %31
    %vm33 = vcmask 786112
    %34 = vst.msk [vmem:[#allocation0] sm:$0x1] %vm33, %v32
    %s35 = scalar_lea.vmem %s0, 10
    %v36 = vld [vmem:[%s35] sm:$0x1]
    %37 = vrot.lane.b32.xlu0 %v36, 80
    %v38 = vpop.permute.xlu0 %37
    %vm39 = vcmask 720512
    %40 = vst.msk [vmem:[#allocation0] sm:$0x1] %vm39, %v38
    %s41 = scalar_lea.vmem %s0, 9
    %v42 = vld [vmem:[%s41] sm:$0x1]
    %43 = vrot.lane.b32.xlu0 %v42, 72
    %v44 = vpop.permute.xlu0 %43
    %vm45 = vcmask 654912
    %46 = vst.msk [vmem:[#allocation0] sm:$0x1] %vm45, %v44
    %s47 = scalar_lea.vmem %s0, 8
    %v48 = vld [vmem:[%s47] sm:$0x1]
    %49 = vrot.lane.b32.xlu0 %v48, 64
    %v50 = vpop.permute.xlu0 %49
    %vm51 = vcmask 589312
    %52 = vst.msk [vmem:[#allocation0] sm:$0x1] %vm51, %v50
    %s53 = scalar_lea.vmem %s0, 7
    %v54 = vld [vmem:[%s53] sm:$0x1]
    %55 = vrot.lane.b32.xlu0 %v54, 56
    %v56 = vpop.permute.xlu0 %55
    %vm57 = vcmask 523712
    %58 = vst.msk [vmem:[#allocation0] sm:$0x1] %vm57, %v56
    %s59 = scalar_lea.vmem %s0, 6
    %v60 = vld [vmem:[%s59] sm:$0x1]
    %61 = vrot.lane.b32.xlu0 %v60, 48
    %v62 = vpop.permute.xlu0 %61
    %vm63 = vcmask 458112
    %64 = vst.msk [vmem:[#allocation0] sm:$0x1] %vm63, %v62
    %s65 = scalar_lea.vmem %s0, 5
    %v66 = vld [vmem:[%s65] sm:$0x1]
    %67 = vrot.lane.b32.xlu0 %v66, 40
    %v68 = vpop.permute.xlu0 %67
    %vm69 = vcmask 392512
    %70 = vst.msk [vmem:[#allocation0] sm:$0x1] %vm69, %v68
    %s71 = scalar_lea.vmem %s0, 4
    %v72 = vld [vmem:[%s71] sm:$0x1]
    %73 = vrot.lane.b32.xlu0 %v72, 32
    %v74 = vpop.permute.xlu0 %73
    %vm75 = vcmask 326912
    %76 = vst.msk [vmem:[#allocation0] sm:$0x1] %vm75, %v74
    %s77 = scalar_lea.vmem %s0, 3
    %v78 = vld [vmem:[%s77] sm:$0x1]
    %79 = vrot.lane.b32.xlu0 %v78, 24
    %v80 = vpop.permute.xlu0 %79
    %vm81 = vcmask 261312
    %82 = vst.msk [vmem:[#allocation0] sm:$0x1] %vm81, %v80
    %s83 = scalar_lea.vmem %s0, 2
    %v84 = vld [vmem:[%s83] sm:$0x1]
    %85 = vrot.lane.b32.xlu0 %v84, 16
    %v86 = vpop.permute.xlu0 %85
    %vm87 = vcmask 195712
    %88 = vst.msk [vmem:[#allocation0] sm:$0x1] %vm87, %v86
    %s89 = scalar_lea.vmem %s0, 1
    %v90 = vld [vmem:[%s89] sm:$0x1]
    %91 = vrot.lane.b32.xlu0 %v90, 8
    %v92 = vpop.permute.xlu0 %91
    %vm93 = vcmask 130112
    %94 = vst.msk [vmem:[#allocation0] sm:$0x1] %vm93, %v92
    %s96 = sshll.u32 1, 1
    %s97 = ssub.s32 %s96, 1
    %v99 = vld [vmem:[#allocation0] sm:%s97]
    %s100 = sshll.u32 1, 1
    %s101 = ssub.s32 %s100, 1
    %102 = vst [vmem:[%s1] sm:%s101] %v99

// kernel: packed_up_forward.1
$region0: #{packed_up_forward.1}
  #allocation0 [shape = 'u32[]', space=smem, size = 0x4, offset = 0x4, fixed_abs, tag = 'smem constant byte address 0x4 - core index']
  #allocation1 [shape = 'u32[144,128]{1,0:T(1,128)}', space=vmem, size = 0x12000, scoped, tag = 'internal scratch']
  %s0 = inlined_call_operand.vmem [shape: f32[2,8,64], index: 0, kind: input, shape index: {}]
  %s1 = inlined_call_operand.vmem [shape: f32[2,16,128], index: 1, kind: input, shape index: {}]
  %s2 = inlined_call_operand.vmem [shape: f32[16,8], index: 2, kind: input, shape index: {}]
  %s3 = inlined_call_operand.vmem [shape: f32[576,128], index: 3, kind: input, shape index: {}]
  %s4 = inlined_call_operand.vmem [shape: f32[1,128], index: 4, kind: input, shape index: {}]
  %s5 = inlined_call_operand.vmem [shape: f32[1,128], index: 5, kind: input, shape index: {}]
  %s6 = inlined_call_operand.vmem [shape: f32[384,128], index: 6, kind: input, shape index: {}]
  %s7 = inlined_call_operand.vmem [shape: f32[1,128], index: 7, kind: input, shape index: {}]
  %s8 = inlined_call_operand.vmem [shape: f32[1,128], index: 8, kind: input, shape index: {}]
  %s9 = inlined_call_operand.vmem [shape: f32[2,16,128], index: 9, kind: output, shape index: {}]
  %s10 = sld [smem:[#allocation0]]
  $region69: #{packed_up_forward.1} parent=0
    _
  %s12 = ssub.s32 1, %s10
  %s13 = scalar_select 0, %s12, %s10
  loop: start=0, step=1, limit=4
  $region2: #{packed_up_forward.1} parent=0 // loop_pre_header
    _
  $region3: #{packed_up_forward.1} parent=0 // loop_header
    %s15 = sphi 0, %s19
    %p16 = scmp.ge.s32.totalorder %s15, 4
    %s25 = sphi 0, %s27
    %s28 = sphi 0, %s25
    %s29 = sphi 0, %s28
    %s45 = sphi 0, %s29
    %s51 = sphi 0, %s53
    %s54 = sphi 0, %s51
    %s55 = sphi 0, %s54
    %s71 = sphi 0, %s55
    %s75 = sphi 0, %s75
    %s77 = sphi 0, %s75
    %s78 = sphi 0, %s77
    %s92 = sphi 0, %s78
    %s96 = sphi 0, %s96
    %s98 = sphi 0, %s96
    %s99 = sphi 0, %s98
    %s113 = sphi 0, %s99
    %s117 = sphi 0, %s117
    %s119 = sphi 0, %s117
    %s120 = sphi 0, %s119
    %s134 = sphi 0, %s120
    %s138 = sphi 0, %s138
    %s140 = sphi 0, %s138
    %s141 = sphi 0, %s140
    %s155 = sphi 0, %s141
    %s159 = sphi 0, %s159
    %s161 = sphi 0, %s159
    %s162 = sphi 0, %s161
    %s176 = sphi 0, %s162
    %s180 = sphi 0, %s180
    %s182 = sphi 0, %s180
    %s183 = sphi 0, %s182
    %s197 = sphi 0, %s183
    %s201 = sphi 0, %s201
    %s203 = sphi 0, %s201
    %s204 = sphi 0, %s203
    %s218 = sphi 0, %s204
    %s224 = sphi 0, %s226
    %s227 = sphi 0, %s224
    %s228 = sphi 0, %s227
    %s244 = sphi 0, %s228
  $region4: #{packed_up_forward.1} parent=0 // loop_header_branch
    %18 = sbr.rel (%p16) target = $region8
  $region5: #{packed_up_forward.1} parent=0 // loop_body
    %s20 = ssub.s32 %s15, 1
    %s21 = ssub.s32 %s15, 2
    %s22 = sadd.s32 %s15, 1
    %s23 = ssub.s32 %s15, %s22
    %p24 = scmp.eq.s32.totalorder %s23, 0
    %s26 = sadd.s32 %s25, 1
    %s27 = scalar_select %p24, %s25, %s26
    %p30 = pneg %p24
    %p31 = scmp.eq.s32.totalorder %s15, 1
    %p32 = por %p30, %p31
    %p33 = scmp.ne.s32.totalorder %s25, %s28
    %p34 = scmp.eq.s32.totalorder %s15, 0
    %p35 = por %p33, %p34
    %p36 = scmp.ne.s32.totalorder %s25, %s28
    %p37 = scmp.eq.s32.totalorder %s20, 1
    %p38 = por %p36, %p37
    %p39 = scmp.ne.s32.totalorder %s28, %s29
    %p40 = scmp.eq.s32.totalorder %s20, 0
    %p41 = por %p39, %p40
    %p42 = scmp.ne.s32.totalorder %s28, %s29
    %p43 = scmp.eq.s32.totalorder %s21, 1
    %p44 = por %p42, %p43
    %p46 = scmp.ne.s32.totalorder %s29, %s45
    %p47 = scmp.eq.s32.totalorder %s21, 0
    %p48 = por %p46, %p47
    %s49 = ssub.s32 %s15, %s22
    %p50 = scmp.eq.s32.totalorder %s49, 0
    %s52 = sadd.s32 %s51, 1
    %s53 = scalar_select %p50, %s51, %s52
    %p56 = pneg %p50
    %p57 = scmp.eq.s32.totalorder %s15, 1
    %p58 = por %p56, %p57
    %p59 = scmp.ne.s32.totalorder %s51, %s54
    %p60 = scmp.eq.s32.totalorder %s15, 0
    %p61 = por %p59, %p60
    %p62 = scmp.ne.s32.totalorder %s51, %s54
    %p63 = scmp.eq.s32.totalorder %s20, 1
    %p64 = por %p62, %p63
    %p65 = scmp.ne.s32.totalorder %s54, %s55
    %p66 = scmp.eq.s32.totalorder %s20, 0
    %p67 = por %p65, %p66
    %p68 = scmp.ne.s32.totalorder %s54, %s55
    %p69 = scmp.eq.s32.totalorder %s21, 1
    %p70 = por %p68, %p69
    %p72 = scmp.ne.s32.totalorder %s55, %s71
    %p73 = scmp.eq.s32.totalorder %s21, 0
    %p74 = por %p72, %p73
    %s76 = sadd.s32 %s75, 1
    %p79 = scmp.eq.s32.totalorder %s15, 1
    %p80 = scmp.ne.s32.totalorder %s75, %s77
    %p81 = scmp.eq.s32.totalorder %s15, 0
    %p82 = por %p80, %p81
    %p83 = scmp.ne.s32.totalorder %s75, %s77
    %p84 = scmp.eq.s32.totalorder %s20, 1
    %p85 = por %p83, %p84
    %p86 = scmp.ne.s32.totalorder %s77, %s78
    %p87 = scmp.eq.s32.totalorder %s20, 0
    %p88 = por %p86, %p87
    %p89 = scmp.ne.s32.totalorder %s77, %s78
    %p90 = scmp.eq.s32.totalorder %s21, 1
    %p91 = por %p89, %p90
    %p93 = scmp.ne.s32.totalorder %s78, %s92
    %p94 = scmp.eq.s32.totalorder %s21, 0
    %p95 = por %p93, %p94
    %s97 = sadd.s32 %s96, 1
    %p100 = scmp.eq.s32.totalorder %s15, 1
    %p101 = scmp.ne.s32.totalorder %s96, %s98
    %p102 = scmp.eq.s32.totalorder %s15, 0
    %p103 = por %p101, %p102
    %p104 = scmp.ne.s32.totalorder %s96, %s98
    %p105 = scmp.eq.s32.totalorder %s20, 1
    %p106 = por %p104, %p105
    %p107 = scmp.ne.s32.totalorder %s98, %s99
    %p108 = scmp.eq.s32.totalorder %s20, 0
    %p109 = por %p107, %p108
    %p110 = scmp.ne.s32.totalorder %s98, %s99
    %p111 = scmp.eq.s32.totalorder %s21, 1
    %p112 = por %p110, %p111
    %p114 = scmp.ne.s32.totalorder %s99, %s113
    %p115 = scmp.eq.s32.totalorder %s21, 0
    %p116 = por %p114, %p115
    %s118 = sadd.s32 %s117, 1
    %p121 = scmp.eq.s32.totalorder %s15, 1
    %p122 = scmp.ne.s32.totalorder %s117, %s119
    %p123 = scmp.eq.s32.totalorder %s15, 0
    %p124 = por %p122, %p123
    %p125 = scmp.ne.s32.totalorder %s117, %s119
    %p126 = scmp.eq.s32.totalorder %s20, 1
    %p127 = por %p125, %p126
    %p128 = scmp.ne.s32.totalorder %s119, %s120
    %p129 = scmp.eq.s32.totalorder %s20, 0
    %p130 = por %p128, %p129
    %p131 = scmp.ne.s32.totalorder %s119, %s120
    %p132 = scmp.eq.s32.totalorder %s21, 1
    %p133 = por %p131, %p132
    %p135 = scmp.ne.s32.totalorder %s120, %s134
    %p136 = scmp.eq.s32.totalorder %s21, 0
    %p137 = por %p135, %p136
    %s139 = sadd.s32 %s138, 1
    %p142 = scmp.eq.s32.totalorder %s15, 1
    %p143 = scmp.ne.s32.totalorder %s138, %s140
    %p144 = scmp.eq.s32.totalorder %s15, 0
    %p145 = por %p143, %p144
    %p146 = scmp.ne.s32.totalorder %s138, %s140
    %p147 = scmp.eq.s32.totalorder %s20, 1
    %p148 = por %p146, %p147
    %p149 = scmp.ne.s32.totalorder %s140, %s141
    %p150 = scmp.eq.s32.totalorder %s20, 0
    %p151 = por %p149, %p150
    %p152 = scmp.ne.s32.totalorder %s140, %s141
    %p153 = scmp.eq.s32.totalorder %s21, 1
    %p154 = por %p152, %p153
    %p156 = scmp.ne.s32.totalorder %s141, %s155
    %p157 = scmp.eq.s32.totalorder %s21, 0
    %p158 = por %p156, %p157
    %s160 = sadd.s32 %s159, 1
    %p163 = scmp.eq.s32.totalorder %s15, 1
    %p164 = scmp.ne.s32.totalorder %s159, %s161
    %p165 = scmp.eq.s32.totalorder %s15, 0
    %p166 = por %p164, %p165
    %p167 = scmp.ne.s32.totalorder %s159, %s161
    %p168 = scmp.eq.s32.totalorder %s20, 1
    %p169 = por %p167, %p168
    %p170 = scmp.ne.s32.totalorder %s161, %s162
    %p171 = scmp.eq.s32.totalorder %s20, 0
    %p172 = por %p170, %p171
    %p173 = scmp.ne.s32.totalorder %s161, %s162
    %p174 = scmp.eq.s32.totalorder %s21, 1
    %p175 = por %p173, %p174
    %p177 = scmp.ne.s32.totalorder %s162, %s176
    %p178 = scmp.eq.s32.totalorder %s21, 0
    %p179 = por %p177, %p178
    %s181 = sadd.s32 %s180, 1
    %p184 = scmp.eq.s32.totalorder %s15, 1
    %p185 = scmp.ne.s32.totalorder %s180, %s182
    %p186 = scmp.eq.s32.totalorder %s15, 0
    %p187 = por %p185, %p186
    %p188 = scmp.ne.s32.totalorder %s180, %s182
    %p189 = scmp.eq.s32.totalorder %s20, 1
    %p190 = por %p188, %p189
    %p191 = scmp.ne.s32.totalorder %s182, %s183
    %p192 = scmp.eq.s32.totalorder %s20, 0
    %p193 = por %p191, %p192
    %p194 = scmp.ne.s32.totalorder %s182, %s183
    %p195 = scmp.eq.s32.totalorder %s21, 1
    %p196 = por %p194, %p195
    %p198 = scmp.ne.s32.totalorder %s183, %s197
    %p199 = scmp.eq.s32.totalorder %s21, 0
    %p200 = por %p198, %p199
    %s202 = sadd.s32 %s201, 1
    %p205 = scmp.eq.s32.totalorder %s15, 1
    %p206 = scmp.ne.s32.totalorder %s201, %s203
    %p207 = scmp.eq.s32.totalorder %s15, 0
    %p208 = por %p206, %p207
    %p209 = scmp.ne.s32.totalorder %s201, %s203
    %p210 = scmp.eq.s32.totalorder %s20, 1
    %p211 = por %p209, %p210
    %p212 = scmp.ne.s32.totalorder %s203, %s204
    %p213 = scmp.eq.s32.totalorder %s20, 0
    %p214 = por %p212, %p213
    %p215 = scmp.ne.s32.totalorder %s203, %s204
    %p216 = scmp.eq.s32.totalorder %s21, 1
    %p217 = por %p215, %p216
    %p219 = scmp.ne.s32.totalorder %s204, %s218
    %p220 = scmp.eq.s32.totalorder %s21, 0
    %p221 = por %p219, %p220
    %s222 = ssub.s32 %s15, %s22
    %p223 = scmp.eq.s32.totalorder %s222, 0
    %s225 = sadd.s32 %s224, 1
    %s226 = scalar_select %p223, %s224, %s225
    %p229 = pneg %p223
    %p230 = scmp.eq.s32.totalorder %s15, 1
    %p231 = por %p229, %p230
    %p232 = scmp.ne.s32.totalorder %s224, %s227
    %p233 = scmp.eq.s32.totalorder %s15, 0
    %p234 = por %p232, %p233
    %p235 = scmp.ne.s32.totalorder %s224, %s227
    %p236 = scmp.eq.s32.totalorder %s20, 1
    %p237 = por %p235, %p236
    %p238 = scmp.ne.s32.totalorder %s227, %s228
    %p239 = scmp.eq.s32.totalorder %s20, 0
    %p240 = por %p238, %p239
    %p241 = scmp.ne.s32.totalorder %s227, %s228
    %p242 = scmp.eq.s32.totalorder %s21, 1
    %p243 = por %p241, %p242
    %p245 = scmp.ne.s32.totalorder %s228, %s244
    %p246 = scmp.eq.s32.totalorder %s21, 0
    %p247 = por %p245, %p246
    %p248 = scmp.le.s32.totalorder 1, %s15
    %p249 = scmp.lt.s32.totalorder %s15, 3
    %p250 = pnand %p248, %p249
    %p251 = pneg %p250
    // Predicated region
    $region9: #{packed_up_forward.1} parent=5 // pred_check
      _
    $region10: #{packed_up_forward.1} parent=5 // pred_check_branch
      %253 = sbr.rel (%p250) target = $region12
    $region11: #{packed_up_forward.1} parent=5 // pred_region
      %s254 = ssub.s32 %s15, 1
      // Predicated region
      $region13: #{packed_up_forward.1} parent=11 // pred_check
        %p255 = pneg %p88
      $region14: #{packed_up_forward.1} parent=11 // pred_check_branch
        %257 = sbr.rel (%p255) target = $region16
      $region15: #{packed_up_forward.1} parent=11 // pred_region
        _
      $region16: #{packed_up_forward.1} parent=11 // pred_fallthru
        _
      // Predicated region
      $region17: #{packed_up_forward.1} parent=11 // pred_check
        %p258 = pneg %p109
      $region18: #{packed_up_forward.1} parent=11 // pred_check_branch
        %260 = sbr.rel (%p258) target = $region20
      $region19: #{packed_up_forward.1} parent=11 // pred_region
        _
      $region20: #{packed_up_forward.1} parent=11 // pred_fallthru
        _
      // Predicated region
      $region21: #{packed_up_forward.1} parent=11 // pred_check
        %p261 = pneg %p130
      $region22: #{packed_up_forward.1} parent=11 // pred_check_branch
        %263 = sbr.rel (%p261) target = $region24
      $region23: #{packed_up_forward.1} parent=11 // pred_region
        _
      $region24: #{packed_up_forward.1} parent=11 // pred_fallthru
        _
      // Predicated region
      $region25: #{packed_up_forward.1} parent=11 // pred_check
        %p264 = pneg %p151
      $region26: #{packed_up_forward.1} parent=11 // pred_check_branch
        %266 = sbr.rel (%p264) target = $region28
      $region27: #{packed_up_forward.1} parent=11 // pred_region
        _
      $region28: #{packed_up_forward.1} parent=11 // pred_fallthru
        _
      // Predicated region
      $region29: #{packed_up_forward.1} parent=11 // pred_check
        %p267 = pneg %p172
      $region30: #{packed_up_forward.1} parent=11 // pred_check_branch
        %269 = sbr.rel (%p267) target = $region32
      $region31: #{packed_up_forward.1} parent=11 // pred_region
        _
      $region32: #{packed_up_forward.1} parent=11 // pred_fallthru
        _
      // Predicated region
      $region33: #{packed_up_forward.1} parent=11 // pred_check
        %p270 = pneg %p193
      $region34: #{packed_up_forward.1} parent=11 // pred_check_branch
        %272 = sbr.rel (%p270) target = $region36
      $region35: #{packed_up_forward.1} parent=11 // pred_region
        _
      $region36: #{packed_up_forward.1} parent=11 // pred_fallthru
        _
      // Predicated region
      $region37: #{packed_up_forward.1} parent=11 // pred_check
        %p273 = pneg %p214
      $region38: #{packed_up_forward.1} parent=11 // pred_check_branch
        %275 = sbr.rel (%p273) target = $region40
      $region39: #{packed_up_forward.1} parent=11 // pred_region
        _
      $region40: #{packed_up_forward.1} parent=11 // pred_fallthru
        _
    $region12: #{packed_up_forward.1} parent=5 // pred_fallthru
      _
    %p276 = scmp.lt.s32.totalorder %s15, 2
    // Predicated region
    $region41: #{packed_up_forward.1} parent=5 // pred_check
      %p277 = pneg %p276
    $region42: #{packed_up_forward.1} parent=5 // pred_check_branch
      %279 = sbr.rel (%p277) target = $region44
    $region43: #{packed_up_forward.1} parent=5 // pred_region
      // Predicated region
      $region45: #{packed_up_forward.1} parent=43 // pred_check
        %p280 = pneg %p35
      $region46: #{packed_up_forward.1} parent=43 // pred_check_branch
        %282 = sbr.rel (%p280) target = $region48
      $region47: #{packed_up_forward.1} parent=43 // pred_region
        %p283 = scmp.lt.s32.totalorder %s15, 1
        %s284 = scalar_select %p283, %s15, 1
        %s285 = smul.addr %s284, 8
        %s286 = scalar_lea.vmem %s0, %s285
      $region48: #{packed_up_forward.1} parent=43 // pred_fallthru
        _
      // Predicated region
      $region49: #{packed_up_forward.1} parent=43 // pred_check
        %p287 = pneg %p61
      $region50: #{packed_up_forward.1} parent=43 // pred_check_branch
        %289 = sbr.rel (%p287) target = $region52
      $region51: #{packed_up_forward.1} parent=43 // pred_region
        %p290 = scmp.lt.s32.totalorder %s15, 1
        %s291 = scalar_select %p290, %s15, 1
        %s292 = smul.addr %s291, 2
        %s293 = smul.addr %s292, 8
        %s294 = scalar_lea.vmem %s1, %s293
      $region52: #{packed_up_forward.1} parent=43 // pred_fallthru
        _
    $region44: #{packed_up_forward.1} parent=5 // pred_fallthru
      _
    %p295 = scmp.le.s32.totalorder 1, %s15
    %p296 = scmp.lt.s32.totalorder %s15, 3
    %p297 = pnand %p295, %p296
    %p298 = pneg %p297
    // Predicated region
    $region53: #{packed_up_forward.1} parent=5 // pred_check
      _
    $region54: #{packed_up_forward.1} parent=5 // pred_check_branch
      %300 = sbr.rel (%p297) target = $region56
    $region55: #{packed_up_forward.1} parent=5 // pred_region
      %s301 = ssub.s32 %s15, 1
      %p302 = scmp.lt.s32.totalorder %s20, 1
      %s303 = scalar_select %p302, %s20, 1
      %s304 = smul.addr %s303, 8
      %s305 = scalar_lea.vmem %s0, %s304
      %p306 = pneg %p41
      %p307 = pneg %p38
      %p308 = scmp.lt.s32.totalorder %s20, 1
      %s309 = scalar_select %p308, %s20, 1
      %s310 = smul.addr %s309, 2
      %s311 = smul.addr %s310, 8
      %s312 = scalar_lea.vmem %s1, %s311
      %p313 = pneg %p67
      %p314 = pneg %p64
      %p315 = pneg %p88
      %p316 = pneg %p85
      %p317 = pneg %p109
      %p318 = pneg %p106
      %p319 = pneg %p130
      %p320 = pneg %p127
      %p321 = pneg %p151
      %p322 = pneg %p148
      %p323 = pneg %p172
      %p324 = pneg %p169
      %p325 = pneg %p193
      %p326 = pneg %p190
      %p327 = pneg %p214
      %p328 = pneg %p211
      %p329 = pneg %p240
      %p330 = pneg %p237
      %p331 = scmp.lt.s32.totalorder %s20, 1
      %s332 = scalar_select %p331, %s20, 1
      %s333 = smul.addr %s332, 2
      %s334 = smul.addr %s333, 8
      %s335 = scalar_lea.vmem %s9, %s334
      %p336 = scmp.lt.s32.totalorder %s20, 1
      %s337 = scalar_select %p336, %s20, 1
      %s338 = smul.addr %s337, 8
      %s339 = scalar_lea.vmem %s0, %s338
      %p340 = scmp.lt.s32.totalorder %s20, 1
      %s341 = scalar_select %p340, %s20, 1
      %s342 = smul.addr %s341, 2
      %s343 = smul.addr %s342, 8
      %s344 = scalar_lea.vmem %s1, %s343
      %p345 = scmp.lt.s32.totalorder %s20, 1
      %s346 = scalar_select %p345, %s20, 1
      %s347 = smul.addr %s346, 2
      %s348 = smul.addr %s347, 8
      %s349 = scalar_lea.vmem %s9, %s348
      %v350 = vld [vmem:[%s2] sm:$0xff]
      %v351 = vld [vmem:[%s2 + $0x8] sm:$0xff]
      %v352 = vld [vmem:[%s339] sm:$0xff]
      %vm353 = vcmask 64512
      %v355 = vsel %vm353, %v350, 0
      %v358 = vsel %vm353, %v351, 0
      %360 = vmatprep.subr.mxu0 0.0
      %361 = vmatpush1.msra.mxu0 0.0
      %362 = vmatprep.subr.mxu0 0.0
      %363 = vmatpush1.msra.mxu0 0.0
      %364 = vmatprep.subr.mxu0 0.0
      %365 = vmatpush1.msra.mxu0 0.0
      %366 = vmatprep.subr.mxu0 0.0
      %367 = vmatpush1.msra.mxu0 0.0
      %368 = vmatprep.subr.mxu0 0.0
      %369 = vmatpush1.msra.mxu0 0.0
      %370 = vmatprep.subr.mxu0 0.0
      %371 = vmatpush1.msra.mxu0 0.0
      %372 = vmatprep.subr.mxu0 0.0
      %373 = vmatpush1.msra.mxu0 0.0
      %374 = vmatprep.subr.mxu0 0.0
      %375 = vmatpush1.msra.mxu0 0.0
      %376 = vmatprep.subr.mxu0 0.0
      %377 = vmatpush1.msra.mxu0 0.0
      %378 = vmatprep.subr.mxu0 0.0
      %379 = vmatpush1.msra.mxu0 0.0
      %380 = vmatprep.subr.mxu0 0.0
      %381 = vmatpush1.msra.mxu0 0.0
      %382 = vmatprep.subr.mxu0 0.0
      %383 = vmatpush1.msra.mxu0 0.0
      %384 = vmatprep.subr.mxu0 0.0
      %385 = vmatpush1.msra.mxu0 0.0
      %386 = vmatprep.subr.mxu0 0.0
      %387 = vmatpush1.msra.mxu0 0.0
      %388 = vmatprep.subr.mxu0 0.0
      %389 = vmatpush1.msra.mxu0 0.0
      %390 = vmatprep.subr.mxu0 0.0
      %391 = vmatpush1.msra.mxu0 %v352
      %392 = vmatprep.subr.mxu0 0.0
      %393 = vmatpush2.msra.mxu0 0.0
      %394 = vmatprep.subr.mxu0 0.0
      %395 = vmatpush2.msra.mxu0 0.0
      %396 = vmatprep.subr.mxu0 0.0
      %397 = vmatpush2.msra.mxu0 0.0
      %398 = vmatprep.subr.mxu0 0.0
      %399 = vmatpush2.msra.mxu0 0.0
      %400 = vmatprep.subr.mxu0 0.0
      %401 = vmatpush2.msra.mxu0 0.0
      %402 = vmatprep.subr.mxu0 0.0
      %403 = vmatpush2.msra.mxu0 0.0
      %404 = vmatprep.subr.mxu0 0.0
      %405 = vmatpush2.msra.mxu0 0.0
      %406 = vmatprep.subr.mxu0 0.0
      %407 = vmatpush2.msra.mxu0 0.0
      %408 = vmatprep.subr.mxu0 0.0
      %409 = vmatpush2.msra.mxu0 0.0
      %410 = vmatprep.subr.mxu0 0.0
      %411 = vmatpush2.msra.mxu0 0.0
      %412 = vmatprep.subr.mxu0 0.0
      %413 = vmatpush2.msra.mxu0 0.0
      %414 = vmatprep.subr.mxu0 0.0
      %415 = vmatpush2.msra.mxu0 0.0
      %416 = vmatprep.subr.mxu0 0.0
      %417 = vmatpush2.msra.mxu0 0.0
      %418 = vmatprep.subr.mxu0 0.0
      %419 = vmatpush2.msra.mxu0 0.0
      %420 = vmatprep.subr.mxu0 0.0
      %421 = vmatpush2.msra.mxu0 0.0
      %422 = vmatprep.subr.mxu0 0.0
      %423 = vmatpush2.msra.mxu0 0.0
      %424 = vmatprep.mubr.f32.mxu0 0.0
      %425 = vmatmul.mubr.f32.gmra.mxu0 %v355
      %v426 = vpop.f32.mrf.mxu0
      %v427 = vadd.f32 0.0, %v426
      %v428 = vpop.f32.mrf.mxu0
      %429 = vmatprep.mubr.f32.mxu0 0.0
      %430 = vmatmul.mubr.f32.gmra.mxu0 %v358
      %v431 = vpop.f32.mrf.mxu0
      %v432 = vadd.f32 0.0, %v431
      %v433 = vpop.f32.mrf.mxu0
      %434 = vdwg.mxu0
      %vm437 = vcmask 1040384
      %v438 = vrot.slane %v427, 7
      %v439 = vrot.slane %v432, 7
      %v440 = vsel %vm437, %v438, %v439
      %v444 = vsel %vm437, 0.0, %v438
      %v445 = vsel %vm437, %v439, 0.0
      %v446 = vld [vmem:[%s344] sm:$0xff]
      %v447 = vld [vmem:[%s344 + $0x8] sm:$0xff]
      %v450 = vrot.slane %v446, 7
      %v451 = vrot.slane %v447, 7
      %v452 = vsel %vm437, %v450, %v451
      %v456 = vsel %vm437, 0.0, %v450
      %v457 = vsel %vm437, %v451, 0.0
      %vm460 = vcmask 1046528
      %v461 = vrot.slane %v456, 1
      %v462 = vrot.slane %v452, 1
      %v463 = vsel %vm460, %v461, %v462
      %v464 = vrot.slane %v457, 1
      %v465 = vsel %vm460, %v462, %v464
      %vm468 = vcmask 1045504
      %v469 = vrot.slane %v456, 2
      %v470 = vrot.slane %v452, 2
      %v471 = vsel %vm468, %v469, %v470
      %v472 = vrot.slane %v457, 2
      %v473 = vsel %vm468, %v470, %v472
      %v478 = vrot.slane %v444, 1
      %v479 = vrot.slane %v440, 1
      %v480 = vsel %vm460, %v478, %v479
      %v481 = vrot.slane %v445, 1
      %v482 = vsel %vm460, %v479, %v481
      %483 = vrot.lane.b32.xlu0 %v480, 64
      %v484 = vpop.permute.xlu0 %483
      %485 = vrot.lane.b32.xlu0 %v482, 64
      %v486 = vpop.permute.xlu0 %485
      %v489 = vrot.slane %v444, 2
      %v490 = vrot.slane %v440, 2
      %v491 = vsel %vm468, %v489, %v490
      %v492 = vrot.slane %v445, 2
      %v493 = vsel %vm468, %v490, %v492
      %vm494 = vcmask 523264
      %v495 = vsel %vm494, %v444, %v484
      %v496 = vsel %vm494, %v440, %v486
      %v497 = vld [vmem:[%s3] sm:$0xff]
      %v498 = vld [vmem:[%s3 + $0x8] sm:$0xff]
      %v499 = vld [vmem:[%s3 + $0x10] sm:$0xff]
      %v500 = vld [vmem:[%s3 + $0x18] sm:$0xff]
      %v501 = vld [vmem:[%s3 + $0x20] sm:$0xff]
      %v502 = vld [vmem:[%s3 + $0x28] sm:$0xff]
      %v503 = vld [vmem:[%s3 + $0x30] sm:$0xff]
      %v504 = vld [vmem:[%s3 + $0x38] sm:$0xff]
      %v505 = vld [vmem:[%s3 + $0x40] sm:$0xff]
      %v506 = vld [vmem:[%s3 + $0x48] sm:$0xff]
      %v507 = vld [vmem:[%s3 + $0x50] sm:$0xff]
      %v508 = vld [vmem:[%s3 + $0x58] sm:$0xff]
      %v509 = vld [vmem:[%s3 + $0x60] sm:$0xff]
      %v510 = vld [vmem:[%s3 + $0x68] sm:$0xff]
      %v511 = vld [vmem:[%s3 + $0x70] sm:$0xff]
      %v512 = vld [vmem:[%s3 + $0x78] sm:$0xff]
      %v513 = vld [vmem:[%s3 + $0x80] sm:$0xff]
      %v514 = vld [vmem:[%s3 + $0x88] sm:$0xff]
      %v515 = vld [vmem:[%s3 + $0x90] sm:$0xff]
      %v516 = vld [vmem:[%s3 + $0x98] sm:$0xff]
      %v517 = vld [vmem:[%s3 + $0xa0] sm:$0xff]
      %v518 = vld [vmem:[%s3 + $0xa8] sm:$0xff]
      %v519 = vld [vmem:[%s3 + $0xb0] sm:$0xff]
      %v520 = vld [vmem:[%s3 + $0xb8] sm:$0xff]
      %v521 = vld [vmem:[%s3 + $0xc0] sm:$0xff]
      %v522 = vld [vmem:[%s3 + $0xc8] sm:$0xff]
      %v523 = vld [vmem:[%s3 + $0xd0] sm:$0xff]
      %v524 = vld [vmem:[%s3 + $0xd8] sm:$0xff]
      %v525 = vld [vmem:[%s3 + $0xe0] sm:$0xff]
      %v526 = vld [vmem:[%s3 + $0xe8] sm:$0xff]
      %v527 = vld [vmem:[%s3 + $0xf0] sm:$0xff]
      %v528 = vld [vmem:[%s3 + $0xf8] sm:$0xff]
      %v529 = vld [vmem:[%s3 + $0x100] sm:$0xff]
      %v530 = vld [vmem:[%s3 + $0x108] sm:$0xff]
      %v531 = vld [vmem:[%s3 + $0x110] sm:$0xff]
      %v532 = vld [vmem:[%s3 + $0x118] sm:$0xff]
      %v533 = vld [vmem:[%s3 + $0x120] sm:$0xff]
      %v534 = vld [vmem:[%s3 + $0x128] sm:$0xff]
      %v535 = vld [vmem:[%s3 + $0x130] sm:$0xff]
      %v536 = vld [vmem:[%s3 + $0x138] sm:$0xff]
      %v537 = vld [vmem:[%s3 + $0x140] sm:$0xff]
      %v538 = vld [vmem:[%s3 + $0x148] sm:$0xff]
      %v539 = vld [vmem:[%s3 + $0x150] sm:$0xff]
      %v540 = vld [vmem:[%s3 + $0x158] sm:$0xff]
      %v541 = vld [vmem:[%s3 + $0x160] sm:$0xff]
      %v542 = vld [vmem:[%s3 + $0x168] sm:$0xff]
      %v543 = vld [vmem:[%s3 + $0x170] sm:$0xff]
      %v544 = vld [vmem:[%s3 + $0x178] sm:$0xff]
      %v545 = vld [vmem:[%s3 + $0x180] sm:$0xff]
      %v546 = vld [vmem:[%s3 + $0x188] sm:$0xff]
      %v547 = vld [vmem:[%s3 + $0x190] sm:$0xff]
      %v548 = vld [vmem:[%s3 + $0x198] sm:$0xff]
      %v549 = vld [vmem:[%s3 + $0x1a0] sm:$0xff]
      %v550 = vld [vmem:[%s3 + $0x1a8] sm:$0xff]
      %v551 = vld [vmem:[%s3 + $0x1b0] sm:$0xff]
      %v552 = vld [vmem:[%s3 + $0x1b8] sm:$0xff]
      %v553 = vld [vmem:[%s3 + $0x1c0] sm:$0xff]
      %v554 = vld [vmem:[%s3 + $0x1c8] sm:$0xff]
      %v555 = vld [vmem:[%s3 + $0x1d0] sm:$0xff]
      %v556 = vld [vmem:[%s3 + $0x1d8] sm:$0xff]
      %v557 = vld [vmem:[%s3 + $0x1e0] sm:$0xff]
      %v558 = vld [vmem:[%s3 + $0x1e8] sm:$0xff]
      %v559 = vld [vmem:[%s3 + $0x1f0] sm:$0xff]
      %v560 = vld [vmem:[%s3 + $0x1f8] sm:$0xff]
      %v561 = vld [vmem:[%s3 + $0x200] sm:$0xff]
      %v562 = vld [vmem:[%s3 + $0x208] sm:$0xff]
      %v563 = vld [vmem:[%s3 + $0x210] sm:$0xff]
      %v564 = vld [vmem:[%s3 + $0x218] sm:$0xff]
      %v565 = vld [vmem:[%s3 + $0x220] sm:$0xff]
      %v566 = vld [vmem:[%s3 + $0x228] sm:$0xff]
      %v567 = vld [vmem:[%s3 + $0x230] sm:$0xff]
      %v568 = vld [vmem:[%s3 + $0x238] sm:$0xff]
      %v569 = vsel %vm494, %v491, 0
      %v571 = vsel %vm494, %v493, 0
      %573 = vmatprep.subr.mxu0 0.0
      %574 = vmatpush1.msra.mxu0 %v512
      %575 = vmatprep.subr.mxu0 0.0
      %576 = vmatpush1.msra.mxu0 %v511
      %577 = vmatprep.subr.mxu0 0.0
      %578 = vmatpush1.msra.mxu0 %v510
      %579 = vmatprep.subr.mxu0 0.0
      %580 = vmatpush1.msra.mxu0 %v509
      %581 = vmatprep.subr.mxu0 0.0
      %582 = vmatpush1.msra.mxu0 %v508
      %583 = vmatprep.subr.mxu0 0.0
      %584 = vmatpush1.msra.mxu0 %v507
      %585 = vmatprep.subr.mxu0 0.0
      %586 = vmatpush1.msra.mxu0 %v506
      %587 = vmatprep.subr.mxu0 0.0
      %588 = vmatpush1.msra.mxu0 %v505
      %589 = vmatprep.subr.mxu0 0.0
      %590 = vmatpush1.msra.mxu0 %v504
      %591 = vmatprep.subr.mxu0 0.0
      %592 = vmatpush1.msra.mxu0 %v503
      %593 = vmatprep.subr.mxu0 0.0
      %594 = vmatpush1.msra.mxu0 %v502
      %595 = vmatprep.subr.mxu0 0.0
      %596 = vmatpush1.msra.mxu0 %v501
      %597 = vmatprep.subr.mxu0 0.0
      %598 = vmatpush1.msra.mxu0 %v500
      %599 = vmatprep.subr.mxu0 0.0
      %600 = vmatpush1.msra.mxu0 %v499
      %601 = vmatprep.subr.mxu0 0.0
      %602 = vmatpush1.msra.mxu0 %v498
      %603 = vmatprep.subr.mxu0 0.0
      %604 = vmatpush1.msra.mxu0 %v497
      %605 = vmatprep.subr.mxu0 0.0
      %606 = vmatpush2.msra.mxu0 %v528
      %607 = vmatprep.subr.mxu0 0.0
      %608 = vmatpush2.msra.mxu0 %v527
      %609 = vmatprep.subr.mxu0 0.0
      %610 = vmatpush2.msra.mxu0 %v526
      %611 = vmatprep.subr.mxu0 0.0
      %612 = vmatpush2.msra.mxu0 %v525
      %613 = vmatprep.subr.mxu0 0.0
      %614 = vmatpush2.msra.mxu0 %v524
      %615 = vmatprep.subr.mxu0 0.0
      %616 = vmatpush2.msra.mxu0 %v523
      %617 = vmatprep.subr.mxu0 0.0
      %618 = vmatpush2.msra.mxu0 %v522
      %619 = vmatprep.subr.mxu0 0.0
      %620 = vmatpush2.msra.mxu0 %v521
      %621 = vmatprep.subr.mxu0 0.0
      %622 = vmatpush2.msra.mxu0 %v520
      %623 = vmatprep.subr.mxu0 0.0
      %624 = vmatpush2.msra.mxu0 %v519
      %625 = vmatprep.subr.mxu0 0.0
      %626 = vmatpush2.msra.mxu0 %v518
      %627 = vmatprep.subr.mxu0 0.0
      %628 = vmatpush2.msra.mxu0 %v517
      %629 = vmatprep.subr.mxu0 0.0
      %630 = vmatpush2.msra.mxu0 %v516
      %631 = vmatprep.subr.mxu0 0.0
      %632 = vmatpush2.msra.mxu0 %v515
      %633 = vmatprep.subr.mxu0 0.0
      %634 = vmatpush2.msra.mxu0 %v514
      %635 = vmatprep.subr.mxu0 0.0
      %636 = vmatpush2.msra.mxu0 %v513
      %637 = vmatprep.mubr.f32.mxu0 %v463
      %638 = vmatmul.mubr.f32.gmra.mxu0 %v456
      %v639 = vpop.f32.mrf.mxu0
      %v640 = vadd.f32 0.0, %v639
      %v641 = vpop.f32.mrf.mxu0
      %642 = vmatprep.mubr.f32.mxu0 %v465
      %643 = vmatmul.mubr.f32.gmra.mxu0 %v452
      %v644 = vpop.f32.mrf.mxu0
      %v645 = vadd.f32 0.0, %v644
      %v646 = vpop.f32.mrf.mxu0
      %647 = vdwg.mxu0
      %648 = vmatprep.subr.mxu0 0.0
      %649 = vmatpush1.msra.mxu0 %v544
      %650 = vmatprep.subr.mxu0 0.0
      %651 = vmatpush1.msra.mxu0 %v543
      %652 = vmatprep.subr.mxu0 0.0
      %653 = vmatpush1.msra.mxu0 %v542
      %654 = vmatprep.subr.mxu0 0.0
      %655 = vmatpush1.msra.mxu0 %v541
      %656 = vmatprep.subr.mxu0 0.0
      %657 = vmatpush1.msra.mxu0 %v540
      %658 = vmatprep.subr.mxu0 0.0
      %659 = vmatpush1.msra.mxu0 %v539
      %660 = vmatprep.subr.mxu0 0.0
      %661 = vmatpush1.msra.mxu0 %v538
      %662 = vmatprep.subr.mxu0 0.0
      %663 = vmatpush1.msra.mxu0 %v537
      %664 = vmatprep.subr.mxu0 0.0
      %665 = vmatpush1.msra.mxu0 %v536
      %666 = vmatprep.subr.mxu0 0.0
      %667 = vmatpush1.msra.mxu0 %v535
      %668 = vmatprep.subr.mxu0 0.0
      %669 = vmatpush1.msra.mxu0 %v534
      %670 = vmatprep.subr.mxu0 0.0
      %671 = vmatpush1.msra.mxu0 %v533
      %672 = vmatprep.subr.mxu0 0.0
      %673 = vmatpush1.msra.mxu0 %v532
      %674 = vmatprep.subr.mxu0 0.0
      %675 = vmatpush1.msra.mxu0 %v531
      %676 = vmatprep.subr.mxu0 0.0
      %677 = vmatpush1.msra.mxu0 %v530
      %678 = vmatprep.subr.mxu0 0.0
      %679 = vmatpush1.msra.mxu0 %v529
      %680 = vmatprep.subr.mxu0 0.0
      %681 = vmatpush2.msra.mxu0 %v560
      %682 = vmatprep.subr.mxu0 0.0
      %683 = vmatpush2.msra.mxu0 %v559
      %684 = vmatprep.subr.mxu0 0.0
      %685 = vmatpush2.msra.mxu0 %v558
      %686 = vmatprep.subr.mxu0 0.0
      %687 = vmatpush2.msra.mxu0 %v557
      %688 = vmatprep.subr.mxu0 0.0
      %689 = vmatpush2.msra.mxu0 %v556
      %690 = vmatprep.subr.mxu0 0.0
      %691 = vmatpush2.msra.mxu0 %v555
      %692 = vmatprep.subr.mxu0 0.0
      %693 = vmatpush2.msra.mxu0 %v554
      %694 = vmatprep.subr.mxu0 0.0
      %695 = vmatpush2.msra.mxu0 %v553
      %696 = vmatprep.subr.mxu0 0.0
      %697 = vmatpush2.msra.mxu0 %v552
      %698 = vmatprep.subr.mxu0 0.0
      %699 = vmatpush2.msra.mxu0 %v551
      %700 = vmatprep.subr.mxu0 0.0
      %701 = vmatpush2.msra.mxu0 %v550
      %702 = vmatprep.subr.mxu0 0.0
      %703 = vmatpush2.msra.mxu0 %v549
      %704 = vmatprep.subr.mxu0 0.0
      %705 = vmatpush2.msra.mxu0 %v548
      %706 = vmatprep.subr.mxu0 0.0
      %707 = vmatpush2.msra.mxu0 %v547
      %708 = vmatprep.subr.mxu0 0.0
      %709 = vmatpush2.msra.mxu0 %v546
      %710 = vmatprep.subr.mxu0 0.0
      %711 = vmatpush2.msra.mxu0 %v545
      %712 = vmatprep.mubr.f32.mxu0 %v495
      %713 = vmatmul.mubr.f32.gmra.mxu0 %v471
      %v714 = vpop.f32.mrf.mxu0
      %v715 = vadd.f32 %v640, %v714
      %v716 = vpop.f32.mrf.mxu0
      %717 = vmatprep.mubr.f32.mxu0 %v496
      %718 = vmatmul.mubr.f32.gmra.mxu0 %v473
      %v719 = vpop.f32.mrf.mxu0
      %v720 = vadd.f32 %v645, %v719
      %v721 = vpop.f32.mrf.mxu0
      %722 = vdwg.mxu0
      %723 = vmatprep.subr.mxu0 0.0
      %724 = vmatpush1.msra.mxu0 0.0
      %725 = vmatprep.subr.mxu0 0.0
      %726 = vmatpush1.msra.mxu0 0.0
      %727 = vmatprep.subr.mxu0 0.0
      %728 = vmatpush1.msra.mxu0 0.0
      %729 = vmatprep.subr.mxu0 0.0
      %730 = vmatpush1.msra.mxu0 0.0
      %731 = vmatprep.subr.mxu0 0.0
      %732 = vmatpush1.msra.mxu0 0.0
      %733 = vmatprep.subr.mxu0 0.0
      %734 = vmatpush1.msra.mxu0 0.0
      %735 = vmatprep.subr.mxu0 0.0
      %736 = vmatpush1.msra.mxu0 0.0
      %737 = vmatprep.subr.mxu0 0.0
      %738 = vmatpush1.msra.mxu0 0.0
      %739 = vmatprep.subr.mxu0 0.0
      %740 = vmatpush1.msra.mxu0 %v568
      %741 = vmatprep.subr.mxu0 0.0
      %742 = vmatpush1.msra.mxu0 %v567
      %743 = vmatprep.subr.mxu0 0.0
      %744 = vmatpush1.msra.mxu0 %v566
      %745 = vmatprep.subr.mxu0 0.0
      %746 = vmatpush1.msra.mxu0 %v565
      %747 = vmatprep.subr.mxu0 0.0
      %748 = vmatpush1.msra.mxu0 %v564
      %749 = vmatprep.subr.mxu0 0.0
      %750 = vmatpush1.msra.mxu0 %v563
      %751 = vmatprep.subr.mxu0 0.0
      %752 = vmatpush1.msra.mxu0 %v562
      %753 = vmatprep.subr.mxu0 0.0
      %754 = vmatpush1.msra.mxu0 %v561
      %755 = vmatprep.subr.mxu0 0.0
      %756 = vmatpush2.msra.mxu0 0.0
      %757 = vmatprep.subr.mxu0 0.0
      %758 = vmatpush2.msra.mxu0 0.0
      %759 = vmatprep.subr.mxu0 0.0
      %760 = vmatpush2.msra.mxu0 0.0
      %761 = vmatprep.subr.mxu0 0.0
      %762 = vmatpush2.msra.mxu0 0.0
      %763 = vmatprep.subr.mxu0 0.0
      %764 = vmatpush2.msra.mxu0 0.0
      %765 = vmatprep.subr.mxu0 0.0
      %766 = vmatpush2.msra.mxu0 0.0
      %767 = vmatprep.subr.mxu0 0.0
      %768 = vmatpush2.msra.mxu0 0.0
      %769 = vmatprep.subr.mxu0 0.0
      %770 = vmatpush2.msra.mxu0 0.0
      %771 = vmatprep.subr.mxu0 0.0
      %772 = vmatpush2.msra.mxu0 0.0
      %773 = vmatprep.subr.mxu0 0.0
      %774 = vmatpush2.msra.mxu0 0.0
      %775 = vmatprep.subr.mxu0 0.0
      %776 = vmatpush2.msra.mxu0 0.0
      %777 = vmatprep.subr.mxu0 0.0
      %778 = vmatpush2.msra.mxu0 0.0
      %779 = vmatprep.subr.mxu0 0.0
      %780 = vmatpush2.msra.mxu0 0.0
      %781 = vmatprep.subr.mxu0 0.0
      %782 = vmatpush2.msra.mxu0 0.0
      %783 = vmatprep.subr.mxu0 0.0
      %784 = vmatpush2.msra.mxu0 0.0
      %785 = vmatprep.subr.mxu0 0.0
      %786 = vmatpush2.msra.mxu0 0.0
      %787 = vmatprep.mubr.f32.mxu0 0.0
      %788 = vmatmul.mubr.f32.gmra.mxu0 %v569
      %v789 = vpop.f32.mrf.mxu0
      %v790 = vadd.f32 %v715, %v789
      %v791 = vpop.f32.mrf.mxu0
      %792 = vmatprep.mubr.f32.mxu0 0.0
      %793 = vmatmul.mubr.f32.gmra.mxu0 %v571
      %v794 = vpop.f32.mrf.mxu0
      %v795 = vadd.f32 %v720, %v794
      %v796 = vpop.f32.mrf.mxu0
      %797 = vdwg.mxu0
      %v798 = vld [vmem:[%s4] sm:$0x1]
      %v800 = vlaneseq
      %v801 = vshrl.u32 %v800, 7
      %v802 = vsub.s32 0, %v801
      %v803 = vrot.slane %v798, %v802
      %v805 = vmul.f32 %v790, %v803
      %v806 = vmul.f32 %v795, %v803
      %v807 = vld [vmem:[%s5] sm:$0x1]
      %v809 = vlaneseq
      %v810 = vshrl.u32 %v809, 7
      %v811 = vsub.s32 0, %v810
      %v812 = vrot.slane %v807, %v811
      %v814 = vadd.f32 %v805, %v812
      %v815 = vadd.f32 %v806, %v812
      %v816 = vmax.f32 %v814, 0.0
      %v817 = vmax.f32 %v815, 0.0
      %v820 = vrot.slane %v816, 7
      %v821 = vrot.slane %v817, 7
      %v822 = vsel %vm437, %v820, %v821
      %v826 = vsel %vm437, 0.0, %v820
      %v827 = vsel %vm437, %v821, 0.0
      %v830 = vrot.slane %v826, 1
      %v831 = vrot.slane %v822, 1
      %v832 = vsel %vm460, %v830, %v831
      %v833 = vrot.slane %v827, 1
      %v834 = vsel %vm460, %v831, %v833
      %v837 = vrot.slane %v826, 2
      %v838 = vrot.slane %v822, 2
      %v839 = vsel %vm468, %v837, %v838
      %v840 = vrot.slane %v827, 2
      %v841 = vsel %vm468, %v838, %v840
      %v844 = vld [vmem:[%s6] sm:$0xff]
      %v845 = vld [vmem:[%s6 + $0x8] sm:$0xff]
      %v846 = vld [vmem:[%s6 + $0x10] sm:$0xff]
      %v847 = vld [vmem:[%s6 + $0x18] sm:$0xff]
      %v848 = vld [vmem:[%s6 + $0x20] sm:$0xff]
      %v849 = vld [vmem:[%s6 + $0x28] sm:$0xff]
      %v850 = vld [vmem:[%s6 + $0x30] sm:$0xff]
      %v851 = vld [vmem:[%s6 + $0x38] sm:$0xff]
      %v852 = vld [vmem:[%s6 + $0x40] sm:$0xff]
      %v853 = vld [vmem:[%s6 + $0x48] sm:$0xff]
      %v854 = vld [vmem:[%s6 + $0x50] sm:$0xff]
      %v855 = vld [vmem:[%s6 + $0x58] sm:$0xff]
      %v856 = vld [vmem:[%s6 + $0x60] sm:$0xff]
      %v857 = vld [vmem:[%s6 + $0x68] sm:$0xff]
      %v858 = vld [vmem:[%s6 + $0x70] sm:$0xff]
      %v859 = vld [vmem:[%s6 + $0x78] sm:$0xff]
      %v860 = vld [vmem:[%s6 + $0x80] sm:$0xff]
      %v861 = vld [vmem:[%s6 + $0x88] sm:$0xff]
      %v862 = vld [vmem:[%s6 + $0x90] sm:$0xff]
      %v863 = vld [vmem:[%s6 + $0x98] sm:$0xff]
      %v864 = vld [vmem:[%s6 + $0xa0] sm:$0xff]
      %v865 = vld [vmem:[%s6 + $0xa8] sm:$0xff]
      %v866 = vld [vmem:[%s6 + $0xb0] sm:$0xff]
      %v867 = vld [vmem:[%s6 + $0xb8] sm:$0xff]
      %v868 = vld [vmem:[%s6 + $0xc0] sm:$0xff]
      %v869 = vld [vmem:[%s6 + $0xc8] sm:$0xff]
      %v870 = vld [vmem:[%s6 + $0xd0] sm:$0xff]
      %v871 = vld [vmem:[%s6 + $0xd8] sm:$0xff]
      %v872 = vld [vmem:[%s6 + $0xe0] sm:$0xff]
      %v873 = vld [vmem:[%s6 + $0xe8] sm:$0xff]
      %v874 = vld [vmem:[%s6 + $0xf0] sm:$0xff]
      %v875 = vld [vmem:[%s6 + $0xf8] sm:$0xff]
      %v876 = vld [vmem:[%s6 + $0x100] sm:$0xff]
      %v877 = vld [vmem:[%s6 + $0x108] sm:$0xff]
      %v878 = vld [vmem:[%s6 + $0x110] sm:$0xff]
      %v879 = vld [vmem:[%s6 + $0x118] sm:$0xff]
      %v880 = vld [vmem:[%s6 + $0x120] sm:$0xff]
      %v881 = vld [vmem:[%s6 + $0x128] sm:$0xff]
      %v882 = vld [vmem:[%s6 + $0x130] sm:$0xff]
      %v883 = vld [vmem:[%s6 + $0x138] sm:$0xff]
      %v884 = vld [vmem:[%s6 + $0x140] sm:$0xff]
      %v885 = vld [vmem:[%s6 + $0x148] sm:$0xff]
      %v886 = vld [vmem:[%s6 + $0x150] sm:$0xff]
      %v887 = vld [vmem:[%s6 + $0x158] sm:$0xff]
      %v888 = vld [vmem:[%s6 + $0x160] sm:$0xff]
      %v889 = vld [vmem:[%s6 + $0x168] sm:$0xff]
      %v890 = vld [vmem:[%s6 + $0x170] sm:$0xff]
      %v891 = vld [vmem:[%s6 + $0x178] sm:$0xff]
      %892 = vmatprep.subr.mxu0 0.0
      %893 = vmatpush1.msra.mxu0 %v859
      %894 = vmatprep.subr.mxu0 0.0
      %895 = vmatpush1.msra.mxu0 %v858
      %896 = vmatprep.subr.mxu0 0.0
      %897 = vmatpush1.msra.mxu0 %v857
      %898 = vmatprep.subr.mxu0 0.0
      %899 = vmatpush1.msra.mxu0 %v856
      %900 = vmatprep.subr.mxu0 0.0
      %901 = vmatpush1.msra.mxu0 %v855
      %902 = vmatprep.subr.mxu0 0.0
      %903 = vmatpush1.msra.mxu0 %v854
      %904 = vmatprep.subr.mxu0 0.0
      %905 = vmatpush1.msra.mxu0 %v853
      %906 = vmatprep.subr.mxu0 0.0
      %907 = vmatpush1.msra.mxu0 %v852
      %908 = vmatprep.subr.mxu0 0.0
      %909 = vmatpush1.msra.mxu0 %v851
      %910 = vmatprep.subr.mxu0 0.0
      %911 = vmatpush1.msra.mxu0 %v850
      %912 = vmatprep.subr.mxu0 0.0
      %913 = vmatpush1.msra.mxu0 %v849
      %914 = vmatprep.subr.mxu0 0.0
      %915 = vmatpush1.msra.mxu0 %v848
      %916 = vmatprep.subr.mxu0 0.0
      %917 = vmatpush1.msra.mxu0 %v847
      %918 = vmatprep.subr.mxu0 0.0
      %919 = vmatpush1.msra.mxu0 %v846
      %920 = vmatprep.subr.mxu0 0.0
      %921 = vmatpush1.msra.mxu0 %v845
      %922 = vmatprep.subr.mxu0 0.0
      %923 = vmatpush1.msra.mxu0 %v844
      %924 = vmatprep.subr.mxu0 0.0
      %925 = vmatpush2.msra.mxu0 %v875
      %926 = vmatprep.subr.mxu0 0.0
      %927 = vmatpush2.msra.mxu0 %v874
      %928 = vmatprep.subr.mxu0 0.0
      %929 = vmatpush2.msra.mxu0 %v873
      %930 = vmatprep.subr.mxu0 0.0
      %931 = vmatpush2.msra.mxu0 %v872
      %932 = vmatprep.subr.mxu0 0.0
      %933 = vmatpush2.msra.mxu0 %v871
      %934 = vmatprep.subr.mxu0 0.0
      %935 = vmatpush2.msra.mxu0 %v870
      %936 = vmatprep.subr.mxu0 0.0
      %937 = vmatpush2.msra.mxu0 %v869
      %938 = vmatprep.subr.mxu0 0.0
      %939 = vmatpush2.msra.mxu0 %v868
      %940 = vmatprep.subr.mxu0 0.0
      %941 = vmatpush2.msra.mxu0 %v867
      %942 = vmatprep.subr.mxu0 0.0
      %943 = vmatpush2.msra.mxu0 %v866
      %944 = vmatprep.subr.mxu0 0.0
      %945 = vmatpush2.msra.mxu0 %v865
      %946 = vmatprep.subr.mxu0 0.0
      %947 = vmatpush2.msra.mxu0 %v864
      %948 = vmatprep.subr.mxu0 0.0
      %949 = vmatpush2.msra.mxu0 %v863
      %950 = vmatprep.subr.mxu0 0.0
      %951 = vmatpush2.msra.mxu0 %v862
      %952 = vmatprep.subr.mxu0 0.0
      %953 = vmatpush2.msra.mxu0 %v861
      %954 = vmatprep.subr.mxu0 0.0
      %955 = vmatpush2.msra.mxu0 %v860
      %956 = vmatprep.mubr.f32.mxu0 %v832
      %957 = vmatmul.mubr.f32.gmra.mxu0 %v826
      %v958 = vpop.f32.mrf.mxu0
      %v959 = vadd.f32 0.0, %v958
      %v960 = vpop.f32.mrf.mxu0
      %961 = vmatprep.mubr.f32.mxu0 %v834
      %962 = vmatmul.mubr.f32.gmra.mxu0 %v822
      %v963 = vpop.f32.mrf.mxu0
      %v964 = vadd.f32 0.0, %v963
      %v965 = vpop.f32.mrf.mxu0
      %966 = vdwg.mxu0
      %967 = vmatprep.subr.mxu0 0.0
      %968 = vmatpush1.msra.mxu0 %v891
      %969 = vmatprep.subr.mxu0 0.0
      %970 = vmatpush1.msra.mxu0 %v890
      %971 = vmatprep.subr.mxu0 0.0
      %972 = vmatpush1.msra.mxu0 %v889
      %973 = vmatprep.subr.mxu0 0.0
      %974 = vmatpush1.msra.mxu0 %v888
      %975 = vmatprep.subr.mxu0 0.0
      %976 = vmatpush1.msra.mxu0 %v887
      %977 = vmatprep.subr.mxu0 0.0
      %978 = vmatpush1.msra.mxu0 %v886
      %979 = vmatprep.subr.mxu0 0.0
      %980 = vmatpush1.msra.mxu0 %v885
      %981 = vmatprep.subr.mxu0 0.0
      %982 = vmatpush1.msra.mxu0 %v884
      %983 = vmatprep.subr.mxu0 0.0
      %984 = vmatpush1.msra.mxu0 %v883
      %985 = vmatprep.subr.mxu0 0.0
      %986 = vmatpush1.msra.mxu0 %v882
      %987 = vmatprep.subr.mxu0 0.0
      %988 = vmatpush1.msra.mxu0 %v881
      %989 = vmatprep.subr.mxu0 0.0
      %990 = vmatpush1.msra.mxu0 %v880
      %991 = vmatprep.subr.mxu0 0.0
      %992 = vmatpush1.msra.mxu0 %v879
      %993 = vmatprep.subr.mxu0 0.0
      %994 = vmatpush1.msra.mxu0 %v878
      %995 = vmatprep.subr.mxu0 0.0
      %996 = vmatpush1.msra.mxu0 %v877
      %997 = vmatprep.subr.mxu0 0.0
      %998 = vmatpush1.msra.mxu0 %v876
      %999 = vmatprep.subr.mxu0 0.0
      %1000 = vmatpush2.msra.mxu0 0.0
      %1001 = vmatprep.subr.mxu0 0.0
      %1002 = vmatpush2.msra.mxu0 0.0
      %1003 = vmatprep.subr.mxu0 0.0
      %1004 = vmatpush2.msra.mxu0 0.0
      %1005 = vmatprep.subr.mxu0 0.0
      %1006 = vmatpush2.msra.mxu0 0.0
      %1007 = vmatprep.subr.mxu0 0.0
      %1008 = vmatpush2.msra.mxu0 0.0
      %1009 = vmatprep.subr.mxu0 0.0
      %1010 = vmatpush2.msra.mxu0 0.0
      %1011 = vmatprep.subr.mxu0 0.0
      %1012 = vmatpush2.msra.mxu0 0.0
      %1013 = vmatprep.subr.mxu0 0.0
      %1014 = vmatpush2.msra.mxu0 0.0
      %1015 = vmatprep.subr.mxu0 0.0
      %1016 = vmatpush2.msra.mxu0 0.0
      %1017 = vmatprep.subr.mxu0 0.0
      %1018 = vmatpush2.msra.mxu0 0.0
      %1019 = vmatprep.subr.mxu0 0.0
      %1020 = vmatpush2.msra.mxu0 0.0
      %1021 = vmatprep.subr.mxu0 0.0
      %1022 = vmatpush2.msra.mxu0 0.0
      %1023 = vmatprep.subr.mxu0 0.0
      %1024 = vmatpush2.msra.mxu0 0.0
      %1025 = vmatprep.subr.mxu0 0.0
      %1026 = vmatpush2.msra.mxu0 0.0
      %1027 = vmatprep.subr.mxu0 0.0
      %1028 = vmatpush2.msra.mxu0 0.0
      %1029 = vmatprep.subr.mxu0 0.0
      %1030 = vmatpush2.msra.mxu0 0.0
      %1031 = vmatprep.mubr.f32.mxu0 0.0
      %1032 = vmatmul.mubr.f32.gmra.mxu0 %v839
      %v1033 = vpop.f32.mrf.mxu0
      %v1034 = vadd.f32 %v959, %v1033
      %v1035 = vpop.f32.mrf.mxu0
      %1036 = vmatprep.mubr.f32.mxu0 0.0
      %1037 = vmatmul.mubr.f32.gmra.mxu0 %v841
      %v1038 = vpop.f32.mrf.mxu0
      %v1039 = vadd.f32 %v964, %v1038
      %v1040 = vpop.f32.mrf.mxu0
      %1041 = vdwg.mxu0
      %v1042 = vld [vmem:[%s7] sm:$0x1]
      %v1044 = vlaneseq
      %v1045 = vshrl.u32 %v1044, 7
      %v1046 = vsub.s32 0, %v1045
      %v1047 = vrot.slane %v1042, %v1046
      %v1049 = vmul.f32 %v1034, %v1047
      %v1050 = vmul.f32 %v1039, %v1047
      %v1051 = vld [vmem:[%s8] sm:$0x1]
      %v1053 = vlaneseq
      %v1054 = vshrl.u32 %v1053, 7
      %v1055 = vsub.s32 0, %v1054
      %v1056 = vrot.slane %v1051, %v1055
      %v1058 = vadd.f32 %v1049, %v1056
      %v1059 = vadd.f32 %v1050, %v1056
      %v1060 = vmax.f32 %v1058, 0.0
      %v1061 = vmax.f32 %v1059, 0.0
      %1062 = vst [vmem:[%s349] sm:$0xff] %v1060
      %1063 = vst [vmem:[%s349 + $0x8] sm:$0xff] %v1061
      %p1064 = scmp.lt.s32.totalorder %s20, 1
      %s1065 = scalar_select %p1064, %s20, 1
      %s1066 = smul.addr %s1065, 2
      %s1067 = smul.addr %s1066, 8
      %s1068 = scalar_lea.vmem %s9, %s1067
      // Predicated region
      $region57: #{packed_up_forward.1} parent=55 // pred_check
        %p1069 = pneg %p237
      $region58: #{packed_up_forward.1} parent=55 // pred_check_branch
        %1071 = sbr.rel (%p1069) target = $region60
      $region59: #{packed_up_forward.1} parent=55 // pred_region
        _
      $region60: #{packed_up_forward.1} parent=55 // pred_fallthru
        _
    $region56: #{packed_up_forward.1} parent=5 // pred_fallthru
      _
    %p1072 = scmp.le.s32.totalorder 2, %s15
    // Predicated region
    $region61: #{packed_up_forward.1} parent=5 // pred_check
      %p1073 = pneg %p1072
    $region62: #{packed_up_forward.1} parent=5 // pred_check_branch
      %1075 = sbr.rel (%p1073) target = $region64
    $region63: #{packed_up_forward.1} parent=5 // pred_region
      %s1076 = ssub.s32 %s15, 2
      // Predicated region
      $region65: #{packed_up_forward.1} parent=63 // pred_check
        %p1077 = pneg %p243
      $region66: #{packed_up_forward.1} parent=63 // pred_check_branch
        %1079 = sbr.rel (%p1077) target = $region68
      $region67: #{packed_up_forward.1} parent=63 // pred_region
        %p1080 = scmp.lt.s32.totalorder %s21, 1
        %s1081 = scalar_select %p1080, %s21, 1
        %s1082 = smul.addr %s1081, 2
        %s1083 = smul.addr %s1082, 8
        %s1084 = scalar_lea.vmem %s9, %s1083
      $region68: #{packed_up_forward.1} parent=63 // pred_fallthru
        _
    $region64: #{packed_up_forward.1} parent=5 // pred_fallthru
      _
  $region6: #{packed_up_forward.1} parent=0 // loop_footer
    %s19 = sadd.s32 1, %s15
  $region7: #{packed_up_forward.1} parent=0 // loop_footer_branch
    %14 = sbr.rel target = $region3
  $region8: #{packed_up_forward.1} parent=0 // loop_exit
    _

</llo_original>
